<compile_context>
chip_gen: v7x
topology: tpu7x:2x2x1
jax: 0.10.0
libtpu: 0.0.40
codegen_flags: <defaults>
</compile_context>

<pallas_src>
import functools

import jax
import jax.numpy as jnp
from jax import lax
from jax.experimental import pallas as pl
from jax.experimental.pallas import tpu as pltpu


def _round_up(x, m):
    return ((x + m - 1) // m) * m


def _cdiv(a, b):
    return (a + b - 1) // b


def _sublane(dtype):
    return max(8, 32 // jnp.dtype(dtype).itemsize)


def _encoder_kernel(x_ref, w_ref, b_ref, out_ref, acc_ref, *, normalize, approx_norm):
    # x_ref: (TN, TK)   w_ref: (TK, E_pad)   b_ref: (1, E_pad)
    # out_ref: (TN, E_pad)   acc_ref: (TN, E_pad) f32 scratch accumulator
    k = pl.program_id(1)

    @pl.when(k == 0)
    def _():
        acc_ref[...] = jnp.zeros_like(acc_ref)

    # MXU-native (M,K)x(K,N): the weight is pre-transposed in the wrapper, so no
    # in-kernel transpose of the weight tile is needed.
    acc_ref[...] += lax.dot_general(
        x_ref[...], w_ref[...],
        dimension_numbers=(((1,), (0,)), ((), ())),
        preferred_element_type=jnp.float32,
    )

    @pl.when(k == pl.num_programs(1) - 1)
    def _():
        feats = acc_ref[...] + b_ref[...].astype(jnp.float32)
        if normalize:
            # eps is added AFTER the sqrt, matching the PyTorch l2norm reference.
            norm = jnp.sqrt(jnp.sum(feats * feats, axis=-1, keepdims=True)) + 1e-8
            feats = feats * pl.reciprocal(norm, approx=approx_norm)
        out_ref[...] = feats.astype(out_ref.dtype)


def encoder_image_weightnorm_precomp(images, v, g, b, *, no_imgnorm=False,
                                     use_bf16_matmul=False, approx_norm=False):
    """images: (..., img_dim); v: (embed_size, img_dim) weight_v; g: scalar weight_g;
    b: (embed_size,) bias.  `use_bf16_matmul` / `approx_norm` are opt-in
    (numerics-affecting) fast paths; defaults reproduce the reference to f32 roundoff."""
    orig_shape = images.shape
    d = orig_shape[-1]
    e = v.shape[0]

    x2d = images.reshape(-1, d)
    n = x2d.shape[0]

    out_dtype = images.dtype
    matmul_dtype = images.dtype
    if use_bf16_matmul and jnp.dtype(images.dtype) == jnp.dtype(jnp.float32):
        matmul_dtype = jnp.bfloat16

    x_bytes = jnp.dtype(matmul_dtype).itemsize
    out_bytes = jnp.dtype(out_dtype).itemsize
    sub = max(_sublane(matmul_dtype), _sublane(out_dtype))

    # --- Hoisted weight_norm(dim=None): W_eff = g * V / ||V||_F, computed once (f32)
    #     and PRE-TRANSPOSED to (D, E) for the MXU-native contraction in the kernel. ---
    v32 = v.astype(jnp.float32)
    scale = jnp.asarray(g, jnp.float32) / jnp.sqrt(jnp.sum(v32 * v32))
    wt = (v32 * scale).T                                  # (D, E), f32
    b32 = b.astype(jnp.float32)

    # --- Lane-dense output (E) and clean contraction (D): pad both to 128 multiples. ---
    e_pad = _round_up(e, 128)
    d_pad = _round_up(d, 128)

    # --- Per-generation VMEM budget (v7x: 64 MiB/TC; v5e/v6e: 128 MiB). ---
    try:
        info = pltpu.get_tpu_info()
        vmem_cap = int(getattr(info, "vmem_capacity_bytes", 0)) or (64 << 20)
    except Exception:
        vmem_cap = 64 << 20                               # v7x-safe fallback
    vmem_cap = min(vmem_cap, 128 << 20)
    vmem_limit = (vmem_cap * 3) // 4
    budget = vmem_cap // 2                                # headroom for compiler temps

    # --- K tiling: the (tk, E_pad) weight block is double-buffered by the pipeline;
    #     keep it under ~half the budget so very large layers fall back to a
    #     pl.when-guarded accumulator over K instead of blowing VMEM / starving rows. ---
    tk = d_pad
    while tk > 128 and 2 * tk * e_pad * x_bytes > budget // 2:
        tk = max(128, _round_up(tk // 2, 128))
    d_pad = _round_up(d_pad, tk)
    k_tiles = d_pad // tk

    # --- Row tile: count x/out double-buffering + the f32 accumulator scratch. ---
    per_row = 2 * tk * x_bytes + 2 * e_pad * out_bytes + e_pad * 4
    fixed = 2 * tk * e_pad * x_bytes + 2 * e_pad * 4      # weight (x2 buffers) + bias
    avail = max(budget - fixed, per_row * sub)
    tn = int(min(avail // per_row, 512, _round_up(n, sub)))   # 512 cap keeps the
    tn = max(sub, (tn // sub) * sub)                          # epilogue working set small
    # v7x megacore balance / pipeline depth: halve until the parallel row axis has
    # at least 4 tiles (when the row count allows it).
    while tn > sub and _cdiv(_round_up(n, sub), tn) < 4:
        tn = max(sub, ((tn // 2) // sub) * sub)

    n_pad = _round_up(n, tn)

    # --- Pad operands: zero rows/cols/bias contribute nothing to the dot or the
    #     row l2-norm, so results are unchanged; padding is stripped afterwards. ---
    x2d = x2d.astype(matmul_dtype)
    if n_pad != n or d_pad != d:
        x2d = jnp.pad(x2d, ((0, n_pad - n), (0, d_pad - d)))
    if d_pad != d or e_pad != e:
        wt = jnp.pad(wt, ((0, d_pad - d), (0, e_pad - e)))
    wt = wt.astype(matmul_dtype)
    if e_pad != e:
        b32 = jnp.pad(b32, (0, e_pad - e))
    b2d = b32.reshape(1, e_pad)

    grid = (n_pad // tn, k_tiles)
    kernel = functools.partial(_encoder_kernel, normalize=not no_imgnorm,
                               approx_norm=approx_norm)

    cost = pl.CostEstimate(
        flops=2 * n_pad * d_pad * e_pad,
        transcendentals=n_pad,
        bytes_accessed=(n_pad * d_pad * x_bytes + d_pad * e_pad * x_bytes
                        + n_pad * e_pad * out_bytes + e_pad * 4),
    )

    out = pl.pallas_call(
        kernel,
        out_shape=jax.ShapeDtypeStruct((n_pad, e_pad), out_dtype),
        grid=grid,
        in_specs=[
            pl.BlockSpec((tn, tk), lambda i, k: (i, k)),      # x: row tile x K slab
            pl.BlockSpec((tk, e_pad), lambda i, k: (k, 0)),   # W^T: K slab, full E
            pl.BlockSpec((1, e_pad), lambda i, k: (0, 0)),    # bias (grid-invariant)
        ],
        out_specs=pl.BlockSpec((tn, e_pad), lambda i, k: (i, 0)),
        scratch_shapes=[pltpu.VMEM((tn, e_pad), jnp.float32)],
        compiler_params=pltpu.CompilerParams(
            dimension_semantics=("parallel", "arbitrary"),    # rows parallel, K reduced
            vmem_limit_bytes=int(vmem_limit),
        ),
        cost_estimate=cost,
    )(x2d, wt, b2d)

    out = out[:n, :e]
    return out.reshape(orig_shape[:-1] + (e,))


def _reference(images, v, g, b, *, no_imgnorm=False):
    v = v.astype(jnp.float32)
    w = v * (g / jnp.sqrt(jnp.sum(v * v)))
    feats = jnp.einsum("...d,ed->...e", images.astype(jnp.float32), w) + b
    if no_imgnorm:
        return feats
    norm = jnp.sqrt(jnp.sum(feats * feats, axis=-1, keepdims=True)) + 1e-8
    return feats / norm


if __name__ == "__main__":
    # Small shapes consistent with the module: precomputed region features.
    batch, n_regions, img_dim, embed_size = 2, 8, 32, 64

    key = jax.random.PRNGKey(0)
    k_img, k_v, k_b = jax.random.split(key, 3)

    images = jax.random.normal(k_img, (batch, n_regions, img_dim), dtype=jnp.float32)

    # Parameter init matching nn.Linear(img_dim, embed_size) + weight_norm(dim=None).
    bound = 1.0 / jnp.sqrt(jnp.float32(img_dim))
    v = jax.random.uniform(k_v, (embed_size, img_dim), minval=-bound, maxval=bound,
                           dtype=jnp.float32)            # weight_v
    g = jnp.sqrt(jnp.sum(v * v))                         # weight_g (scalar) at init
    b = jax.random.uniform(k_b, (embed_size,), minval=-bound, maxval=bound,
                           dtype=jnp.float32)            # bias

    ref = _reference(images, v, g, b)
    ref_ni = _reference(images, v, g, b, no_imgnorm=True)

    # Default (exact, f32) normalized path.
    out = jax.block_until_ready(encoder_image_weightnorm_precomp(images, v, g, b))
    assert out.shape == (batch, n_regions, embed_size)
    assert jnp.allclose(out, ref, atol=1e-5, rtol=1e-5), "mismatch vs reference (l2norm)"

    # no_imgnorm=True path (Linear only).
    out_ni = jax.block_until_ready(
        encoder_image_weightnorm_precomp(images, v, g, b, no_imgnorm=True))
    assert jnp.allclose(out_ni, ref_ni, atol=1e-5, rtol=1e-5), "mismatch (no_imgnorm)"

    # Opt-in fast paths (numerics-affecting): bf16 matmul operands + approx reciprocal.
    out_fast = jax.block_until_ready(
        encoder_image_weightnorm_precomp(images, v, g, b,
                                         use_bf16_matmul=True, approx_norm=True))
    assert jnp.allclose(out_fast, ref, atol=5e-2, rtol=5e-2), "mismatch (bf16/approx path)"

    print("KERNEL_OK")
</pallas_src>

<mosaic_0001>
module attributes {stable_mosaic.version = 11 : i64} {
  func.func @_encoder_kernel(%arg0: i32, %arg1: i32, %arg2: memref<8x128xf32, #tpu.memory_space<vmem>>, %arg3: memref<128x128xf32, #tpu.memory_space<vmem>>, %arg4: memref<1x128xf32, #tpu.memory_space<vmem>>, %arg5: memref<8x128xf32, #tpu.memory_space<vmem>>, %arg6: memref<8x128xf32, #tpu.memory_space<vmem>>) attributes {dimension_semantics = [#tpu.dimension_semantics<parallel>, #tpu.dimension_semantics<arbitrary>], iteration_bounds = array<i64: 2, 1>, scalar_prefetch = 0 : i64, scratch_operands = 1 : i64, tpu.core_type = #tpu.core_type<tc>, window_params = [{transform_indices = @transform_0, window_bounds = array<i64: 8, 128>}, {transform_indices = @transform_1, window_bounds = array<i64: 128, 128>}, {pipeline_mode = #tpu.pipeline_mode<synchronous>, transform_indices = @transform_2, window_bounds = array<i64: 1, 128>}, {transform_indices = @transform_3, window_bounds = array<i64: 8, 128>}]} {
    %c0_i32 = arith.constant 0 : i32
    %0 = arith.cmpi eq, %arg1, %c0_i32 : i32
    %1 = arith.extui %0 : i1 to i32
    %c0_i32_0 = arith.constant 0 : i32
    %2 = arith.cmpi ne, %1, %c0_i32_0 : i32
    scf.if %2 {
      %cst_10 = arith.constant 0.000000e+00 : f32
      %12 = vector.broadcast %cst_10 : f32 to vector<8x128xf32>
      %c0_11 = arith.constant 0 : index
      %c0_12 = arith.constant 0 : index
      %13 = vector.load %arg6[%c0_11, %c0_12] : memref<8x128xf32, #tpu.memory_space<vmem>>, vector<8x128xf32>
      tpu.vector_store %arg6[%c0_11, %c0_12], %12 {strides = array<i32>} : memref<8x128xf32, #tpu.memory_space<vmem>>, vector<8x128xf32>,
    } else {
    }
    %c0 = arith.constant 0 : index
    %c0_1 = arith.constant 0 : index
    %3 = vector.load %arg6[%c0, %c0_1] : memref<8x128xf32, #tpu.memory_space<vmem>>, vector<8x128xf32>
    %c0_2 = arith.constant 0 : index
    %c0_3 = arith.constant 0 : index
    %4 = vector.load %arg2[%c0_2, %c0_3] : memref<8x128xf32, #tpu.memory_space<vmem>>, vector<8x128xf32>
    %c0_4 = arith.constant 0 : index
    %c0_5 = arith.constant 0 : index
    %5 = vector.load %arg3[%c0_4, %c0_5] : memref<128x128xf32, #tpu.memory_space<vmem>>, vector<128x128xf32>
    %cst = arith.constant dense<0.000000e+00> : vector<8x128xf32>
    %6 = tpu.matmul %4, %5, %cst {dimension_numbers = #tpu.dot_dimension_numbers<[1], [0], [0], [1], [0, 0, 1, 1], [], []>} : vector<8x128xf32>, vector<128x128xf32>, vector<8x128xf32> -> vector<8x128xf32>
    %7 = arith.addf %3, %6 : vector<8x128xf32>
    %c0_6 = arith.constant 0 : index
    %c0_7 = arith.constant 0 : index
    %8 = vector.load %arg6[%c0_6, %c0_7] : memref<8x128xf32, #tpu.memory_space<vmem>>, vector<8x128xf32>
    tpu.vector_store %arg6[%c0_6, %c0_7], %7 {strides = array<i32>} : memref<8x128xf32, #tpu.memory_space<vmem>>, vector<8x128xf32>,
    %c0_i32_8 = arith.constant 0 : i32
    %9 = arith.cmpi eq, %arg1, %c0_i32_8 : i32
    %10 = arith.extui %9 : i1 to i32
    %c0_i32_9 = arith.constant 0 : i32
    %11 = arith.cmpi ne, %10, %c0_i32_9 : i32
    scf.if %11 {
      %c0_10 = arith.constant 0 : index
      %c0_11 = arith.constant 0 : index
      %12 = vector.load %arg6[%c0_10, %c0_11] : memref<8x128xf32, #tpu.memory_space<vmem>>, vector<8x128xf32>
      %c0_12 = arith.constant 0 : index
      %c0_13 = arith.constant 0 : index
      %13 = vector.load %arg4[%c0_12, %c0_13] : memref<1x128xf32, #tpu.memory_space<vmem>>, vector<1x128xf32>
      %14 = vector.broadcast %13 : vector<1x128xf32> to vector<8x128xf32>
      %15 = arith.addf %12, %14 : vector<8x128xf32>
      %16 = arith.mulf %15, %15 : vector<8x128xf32>
      %cst_14 = arith.constant dense<0.000000e+00> : vector<8xf32>
      %17 = vector.multi_reduction <add>, %16, %cst_14 [1] : vector<8x128xf32> to vector<8xf32>
      %18 = vector.shape_cast %17 : vector<8xf32> to vector<8x1xf32>
      %19 = math.sqrt %18 : vector<8x1xf32>
      %cst_15 = arith.constant 9.99999993E-9 : f32
      %20 = vector.broadcast %cst_15 : f32 to vector<8x1xf32>
      %21 = arith.addf %19, %20 : vector<8x1xf32>
      %22 = tpu.reciprocal %21 : vector<8x1xf32> -> vector<8x1xf32>
      %23 = vector.broadcast %22 : vector<8x1xf32> to vector<8x128xf32>
      %24 = arith.mulf %15, %23 : vector<8x128xf32>
      %c0_16 = arith.constant 0 : index
      %c0_17 = arith.constant 0 : index
      %25 = vector.load %arg5[%c0_16, %c0_17] : memref<8x128xf32, #tpu.memory_space<vmem>>, vector<8x128xf32>
      tpu.vector_store %arg5[%c0_16, %c0_17], %24 {strides = array<i32>} : memref<8x128xf32, #tpu.memory_space<vmem>>, vector<8x128xf32>,
    } else {
    }
    return
  }
  func.func @transform_0(%arg0: i32, %arg1: i32) -> (i32, i32) {
    %c0_i32 = arith.constant 0 : i32
    return %arg0, %arg1 : i32, i32
  }
  func.func @transform_1(%arg0: i32, %arg1: i32) -> (i32, i32) {
    %c0_i32 = arith.constant 0 : i32
    %c0_i32_0 = arith.constant 0 : i32
    return %arg1, %c0_i32 : i32, i32
  }
  func.func @transform_2(%arg0: i32, %arg1: i32) -> (i32, i32) {
    %c0_i32 = arith.constant 0 : i32
    %c0_i32_0 = arith.constant 0 : i32
    %c0_i32_1 = arith.constant 0 : i32
    return %c0_i32, %c0_i32_0 : i32, i32
  }
  func.func @transform_3(%arg0: i32, %arg1: i32) -> (i32, i32) {
    %c0_i32 = arith.constant 0 : i32
    %c0_i32_0 = arith.constant 0 : i32
    return %arg0, %c0_i32 : i32, i32
  }
}

</mosaic_0001>

<llo_original>
// kernel: tpu_custom_call.1
$region0: #{tpu_custom_call.1}
  #allocation0 [shape = 'u32[]', space=smem, size = 0x4, offset = 0x4, fixed_abs, tag = 'smem constant byte address 0x4 - core index']
  #allocation1 [shape = 'u32[144,128]{1,0:T(1,128)}', space=vmem, size = 0x12000, scoped, tag = 'internal scratch']
  #allocation2 [shape = 'f32[8,128]{1,0:T(8,128)}', space=vmem, size = 0x1000, scoped, tag = 'scratch operand']
  %s0 = inlined_call_operand.hbm [shape: f32[16,128], index: 0, kind: input, shape index: {}]
  %s1 = inlined_call_operand.hbm [shape: f32[128,128], index: 1, kind: input, shape index: {}]
  %s2 = inlined_call_operand.vmem [shape: f32[1,128], index: 2, kind: input, shape index: {}]
  %s3 = inlined_call_operand.hbm [shape: f32[16,128], index: 3, kind: output, shape index: {}]
  %s4 = sld [smem:[#allocation0]]
  $region61: #{tpu_custom_call.1} parent=0
    _
  %s6 = ssub.s32 1, %s4
  %s7 = scalar_select 0, %s6, %s4
  $region1: #{tpu_custom_call.1} parent=0
    #allocation3 [shape = 'u8[8192]{0}', space=vmem, size = 0x2000, scoped, tag = 'input window, operand 0']
    #allocation4 [shape = 's32[2]{0}', space=sflag, size = 0x8, scoped, tag = 'scoped memory for tpu_custom_call.1']
    #allocation5 [shape = 's32[2]{0}', space=sflag, size = 0x8, scoped, tag = 'scoped memory for tpu_custom_call.1']
    #allocation6 [shape = 'u8[65536]{0}', space=vmem, size = 0x10000, scoped, tag = 'input window, operand 1, single buffered']
    #allocation7 [shape = 's32[1]{0}', space=sflag, size = 0x4, scoped, tag = 'scoped memory for tpu_custom_call.1']
    #allocation8 [shape = 'u8[8192]{0}', space=vmem, size = 0x2000, scoped, tag = 'output window, operand 0']
    %8 = vsyncpa [#allocation4], 0
    %s9 = scalar_lea.sflag [#allocation4], 1
    %10 = vsyncpa %s9, 0
    %11 = vsyncpa [#allocation7], 0
    %12 = vsyncpa [#allocation5], 0
    %s13 = scalar_lea.sflag [#allocation5], 1
    %14 = vsyncpa %s13, 0
    loop: start=0, step=1, limit=4
    $region2: #{tpu_custom_call.1} parent=1 // loop_pre_header
      _
    $region3: #{tpu_custom_call.1} parent=1 // loop_header
      %s16 = sphi 0, %s20
      %p17 = scmp.ge.s32.totalorder %s16, 4
      %s23 = sphi 0, %s35
      %s24 = sphi 0, %s31
      %s25 = sphi 0, %s23
      %s26 = sphi 0, %s24
      %s27 = sphi 0, %s25
      %s28 = sphi 0, %s26
      %s40 = sphi 0, %s42
      %s43 = sphi 0, %s40
      %s44 = sphi 0, %s43
      %s60 = sphi 0, %s44
      %s66 = sphi 0, %s68
      %s69 = sphi 0, %s66
      %s70 = sphi 0, %s69
      %s86 = sphi 0, %s70
      %s90 = sphi 0, %s90
      %s92 = sphi 0, %s90
      %s93 = sphi 0, %s92
      %s107 = sphi 0, %s93
      %s113 = sphi 0, %s115
      %s116 = sphi 0, %s113
      %s117 = sphi 0, %s116
      %s133 = sphi 0, %s117
    $region4: #{tpu_custom_call.1} parent=1 // loop_header_branch
      %19 = sbr.rel (%p17) target = $region8
    $region5: #{tpu_custom_call.1} parent=1 // loop_body
      %s21 = ssub.s32 %s16, 1
      %s22 = ssub.s32 %s16, 2
      %s29 = sadd.s32 1, %s24
      %p30 = scmp.ge.s32.totalorder %s29, 1
      %s31 = scalar_select %p30, 0, %s29
      %s32 = sadd.s32 1, %s23
      %s33 = scalar_select %p30, %s32, %s23
      %p34 = scmp.ge.s32.totalorder %s33, 2
      %s35 = scalar_select %p34, 0, %s33
      %s36 = ssub.s32 %s23, %s35
      %s37 = ssub.s32 %s24, %s31
      %s38 = sor.u32 %s36, %s37
      %p39 = scmp.eq.s32.totalorder %s38, 0
      %s41 = sadd.s32 %s40, 1
      %s42 = scalar_select %p39, %s40, %s41
      %p45 = pneg %p39
      %p46 = scmp.eq.s32.totalorder %s16, 1
      %p47 = por %p45, %p46
      %p48 = scmp.ne.s32.totalorder %s40, %s43
      %p49 = scmp.eq.s32.totalorder %s16, 0
      %p50 = por %p48, %p49
      %p51 = scmp.ne.s32.totalorder %s40, %s43
      %p52 = scmp.eq.s32.totalorder %s21, 1
      %p53 = por %p51, %p52
      %p54 = scmp.ne.s32.totalorder %s43, %s44
      %p55 = scmp.eq.s32.totalorder %s21, 0
      %p56 = por %p54, %p55
      %p57 = scmp.ne.s32.totalorder %s43, %s44
      %p58 = scmp.eq.s32.totalorder %s22, 1
      %p59 = por %p57, %p58
      %p61 = scmp.ne.s32.totalorder %s44, %s60
      %p62 = scmp.eq.s32.totalorder %s22, 0
      %p63 = por %p61, %p62
      %s64 = ssub.s32 %s24, %s31
      %p65 = scmp.eq.s32.totalorder %s64, 0
      %s67 = sadd.s32 %s66, 1
      %s68 = scalar_select %p65, %s66, %s67
      %p71 = pneg %p65
      %p72 = scmp.eq.s32.totalorder %s16, 1
      %p73 = por %p71, %p72
      %p74 = scmp.ne.s32.totalorder %s66, %s69
      %p75 = scmp.eq.s32.totalorder %s16, 0
      %p76 = por %p74, %p75
      %p77 = scmp.ne.s32.totalorder %s66, %s69
      %p78 = scmp.eq.s32.totalorder %s21, 1
      %p79 = por %p77, %p78
      %p80 = scmp.ne.s32.totalorder %s69, %s70
      %p81 = scmp.eq.s32.totalorder %s21, 0
      %p82 = por %p80, %p81
      %p83 = scmp.ne.s32.totalorder %s69, %s70
      %p84 = scmp.eq.s32.totalorder %s22, 1
      %p85 = por %p83, %p84
      %p87 = scmp.ne.s32.totalorder %s70, %s86
      %p88 = scmp.eq.s32.totalorder %s22, 0
      %p89 = por %p87, %p88
      %s91 = sadd.s32 %s90, 1
      %p94 = scmp.eq.s32.totalorder %s16, 1
      %p95 = scmp.ne.s32.totalorder %s90, %s92
      %p96 = scmp.eq.s32.totalorder %s16, 0
      %p97 = por %p95, %p96
      %p98 = scmp.ne.s32.totalorder %s90, %s92
      %p99 = scmp.eq.s32.totalorder %s21, 1
      %p100 = por %p98, %p99
      %p101 = scmp.ne.s32.totalorder %s92, %s93
      %p102 = scmp.eq.s32.totalorder %s21, 0
      %p103 = por %p101, %p102
      %p104 = scmp.ne.s32.totalorder %s92, %s93
      %p105 = scmp.eq.s32.totalorder %s22, 1
      %p106 = por %p104, %p105
      %p108 = scmp.ne.s32.totalorder %s93, %s107
      %p109 = scmp.eq.s32.totalorder %s22, 0
      %p110 = por %p108, %p109
      %s111 = ssub.s32 %s23, %s35
      %p112 = scmp.eq.s32.totalorder %s111, 0
      %s114 = sadd.s32 %s113, 1
      %s115 = scalar_select %p112, %s113, %s114
      %p118 = pneg %p112
      %p119 = scmp.eq.s32.totalorder %s16, 1
      %p120 = por %p118, %p119
      %p121 = scmp.ne.s32.totalorder %s113, %s116
      %p122 = scmp.eq.s32.totalorder %s16, 0
      %p123 = por %p121, %p122
      %p124 = scmp.ne.s32.totalorder %s113, %s116
      %p125 = scmp.eq.s32.totalorder %s21, 1
      %p126 = por %p124, %p125
      %p127 = scmp.ne.s32.totalorder %s116, %s117
      %p128 = scmp.eq.s32.totalorder %s21, 0
      %p129 = por %p127, %p128
      %p130 = scmp.ne.s32.totalorder %s116, %s117
      %p131 = scmp.eq.s32.totalorder %s22, 1
      %p132 = por %p130, %p131
      %p134 = scmp.ne.s32.totalorder %s117, %s133
      %p135 = scmp.eq.s32.totalorder %s22, 0
      %p136 = por %p134, %p135
      %p137 = scmp.le.s32.totalorder 1, %s16
      %p138 = scmp.lt.s32.totalorder %s16, 3
      %p139 = pnand %p137, %p138
      %p140 = pneg %p139
      // Predicated region
      $region9: #{tpu_custom_call.1} parent=5 // pred_check
        _
      $region10: #{tpu_custom_call.1} parent=5 // pred_check_branch
        %142 = sbr.rel (%p139) target = $region12
      $region11: #{tpu_custom_call.1} parent=5 // pred_region
        %s143 = ssub.s32 %s16, 1
        // Predicated region
        $region13: #{tpu_custom_call.1} parent=11 // pred_check
          %p144 = pneg %p82
        $region14: #{tpu_custom_call.1} parent=11 // pred_check_branch
          %146 = sbr.rel (%p144) target = $region16
        $region15: #{tpu_custom_call.1} parent=11 // pred_region
          %s147 = smul.u32 16, %s26
          %s149 = ssub.s32 2048, 2048
          %150 = vsyncadd [#allocation7], %s149
          %s151 = smul.addr %s147, 128
          %s152 = scalar_lea.hbm %s1, %s151
          %s153 = sshll.u32 [#allocation6], 4
          %s154 = int_to_ptr.vmem [resolvable:$true] %s153
          %159 = dma.hbm_to_vmem [thread:$0]  %s152, 2048, %s154, [#allocation7], 128, 128, 8
        $region16: #{tpu_custom_call.1} parent=11 // pred_fallthru
          _
        // Predicated region
        $region17: #{tpu_custom_call.1} parent=11 // pred_check
          %p160 = pneg %p103
        $region18: #{tpu_custom_call.1} parent=11 // pred_check_branch
          %162 = sbr.rel (%p160) target = $region20
        $region19: #{tpu_custom_call.1} parent=11 // pred_region
          _
        $region20: #{tpu_custom_call.1} parent=11 // pred_fallthru
          _
      $region12: #{tpu_custom_call.1} parent=5 // pred_fallthru
        _
      %p163 = scmp.lt.s32.totalorder %s16, 2
      // Predicated region
      $region21: #{tpu_custom_call.1} parent=5 // pred_check
        %p164 = pneg %p163
      $region22: #{tpu_custom_call.1} parent=5 // pred_check_branch
        %166 = sbr.rel (%p164) target = $region24
      $region23: #{tpu_custom_call.1} parent=5 // pred_region
        // Predicated region
        $region25: #{tpu_custom_call.1} parent=23 // pred_check
          %p167 = pneg %p50
        $region26: #{tpu_custom_call.1} parent=23 // pred_check_branch
          %169 = sbr.rel (%p167) target = $region28
        $region27: #{tpu_custom_call.1} parent=23 // pred_region
          %s170 = sand.u32 %s40, 1
          %s171 = scalar_lea.sflag [#allocation4], %s170
          %s172 = sand.u32 %s40, 1
          %s173 = smul.addr %s172, 8
          %s174 = scalar_lea.vmem [#allocation3], %s173
          %s176 = ssub.s32 128, 128
          %177 = vsyncadd %s171, %s176
          %s178 = sadd.s32 %s24, %s23
          %s179 = smul.addr %s178, 128
          %s180 = scalar_lea.hbm %s0, %s179
          %s182 = sshll.u32 %s174, 4
          %s183 = int_to_ptr.vmem [resolvable:$true] %s182
          %185 = dma.hbm_to_vmem [thread:$0]  %s180, 128, %s183, %s171
        $region28: #{tpu_custom_call.1} parent=23 // pred_fallthru
          _
      $region24: #{tpu_custom_call.1} parent=5 // pred_fallthru
        _
      %p186 = scmp.le.s32.totalorder 1, %s16
      %p187 = scmp.lt.s32.totalorder %s16, 3
      %p188 = pnand %p186, %p187
      %p189 = pneg %p188
      // Predicated region
      $region29: #{tpu_custom_call.1} parent=5 // pred_check
        _
      $region30: #{tpu_custom_call.1} parent=5 // pred_check_branch
        %191 = sbr.rel (%p188) target = $region32
      $region31: #{tpu_custom_call.1} parent=5 // pred_region
        %s192 = ssub.s32 %s16, 1
        %s193 = sand.u32 %s43, 1
        %s194 = scalar_lea.sflag [#allocation4], %s193
        %s195 = sand.u32 %s43, 1
        %s196 = smul.addr %s195, 8
        %s197 = scalar_lea.vmem [#allocation3], %s196
        // Predicated region
        $region33: #{tpu_custom_call.1} parent=31 // pred_check
          %p198 = pneg %p56
        $region34: #{tpu_custom_call.1} parent=31 // pred_check_branch
          %200 = sbr.rel (%p198) target = $region36
        $region35: #{tpu_custom_call.1} parent=31 // pred_region
          %201 = dma.done %s194, 128
        $region36: #{tpu_custom_call.1} parent=31 // pred_fallthru
          _
        // Predicated region
        $region37: #{tpu_custom_call.1} parent=31 // pred_check
          %p202 = pneg %p82
        $region38: #{tpu_custom_call.1} parent=31 // pred_check_branch
          %204 = sbr.rel (%p202) target = $region40
        $region39: #{tpu_custom_call.1} parent=31 // pred_region
          %205 = dma.done [#allocation7], 2048
        $region40: #{tpu_custom_call.1} parent=31 // pred_fallthru
          _
        %s206 = sand.u32 %s43, 1
        %s207 = scalar_lea.sflag [#allocation4], %s206
        %s208 = sand.u32 %s43, 1
        %s209 = smul.addr %s208, 8
        %s210 = scalar_lea.vmem [#allocation3], %s209
        %p211 = pneg %p56
        %p212 = pneg %p53
        %p213 = pneg %p82
        %p214 = pneg %p79
        %p215 = pneg %p103
        %p216 = pneg %p100
        %p217 = pneg %p129
        %p218 = pneg %p126
        %s219 = sand.u32 %s116, 1
        %s220 = scalar_lea.sflag [#allocation5], %s219
        %s221 = sand.u32 %s116, 1
        %s222 = smul.addr %s221, 8
        %s223 = scalar_lea.vmem [#allocation8], %s222
        %s224 = smul.u32 16, %s26
        %p225 = scmp.eq.s32.totalorder %s26, 0
        // Predicated region
        $region41: #{tpu_custom_call.1} parent=31 // pred_check
          %p226 = pneg %p225
        $region42: #{tpu_custom_call.1} parent=31 // pred_check_branch
          %228 = sbr.rel (%p226) target = $region44
        $region43: #{tpu_custom_call.1} parent=31 // pred_region
          %229 = vst [vmem:[#allocation2] sm:$0xff] 0.0
        $region44: #{tpu_custom_call.1} parent=31 // pred_fallthru
          _
        %v230 = vld [vmem:[#allocation2] sm:$0xff]
        %v231 = vld [vmem:[%s197] sm:$0xff]
        %v232 = vld [vmem:[#allocation6] sm:$0xff]
        %v233 = vld [vmem:[#allocation6 + $0x8] sm:$0xff]
        %v234 = vld [vmem:[#allocation6 + $0x10] sm:$0xff]
        %v235 = vld [vmem:[#allocation6 + $0x18] sm:$0xff]
        %v236 = vld [vmem:[#allocation6 + $0x20] sm:$0xff]
        %v237 = vld [vmem:[#allocation6 + $0x28] sm:$0xff]
        %v238 = vld [vmem:[#allocation6 + $0x30] sm:$0xff]
        %v239 = vld [vmem:[#allocation6 + $0x38] sm:$0xff]
        %v240 = vld [vmem:[#allocation6 + $0x40] sm:$0xff]
        %v241 = vld [vmem:[#allocation6 + $0x48] sm:$0xff]
        %v242 = vld [vmem:[#allocation6 + $0x50] sm:$0xff]
        %v243 = vld [vmem:[#allocation6 + $0x58] sm:$0xff]
        %v244 = vld [vmem:[#allocation6 + $0x60] sm:$0xff]
        %v245 = vld [vmem:[#allocation6 + $0x68] sm:$0xff]
        %v246 = vld [vmem:[#allocation6 + $0x70] sm:$0xff]
        %v247 = vld [vmem:[#allocation6 + $0x78] sm:$0xff]
        %248 = vmatprep.subr.mxu0 0.0
        %249 = vmatpush1.msra.mxu0 %v232
        %250 = vmatprep.subr.mxu0 0.0
        %251 = vmatpush1.msra.mxu0 %v233
        %252 = vmatprep.subr.mxu0 0.0
        %253 = vmatpush1.msra.mxu0 %v234
        %254 = vmatprep.subr.mxu0 0.0
        %255 = vmatpush1.msra.mxu0 %v235
        %256 = vmatprep.subr.mxu0 0.0
        %257 = vmatpush1.msra.mxu0 %v236
        %258 = vmatprep.subr.mxu0 0.0
        %259 = vmatpush1.msra.mxu0 %v237
        %260 = vmatprep.subr.mxu0 0.0
        %261 = vmatpush1.msra.mxu0 %v238
        %262 = vmatprep.subr.mxu0 0.0
        %263 = vmatpush1.msra.mxu0 %v239
        %264 = vmatprep.subr.mxu0 0.0
        %265 = vmatpush1.msra.mxu0 %v240
        %266 = vmatprep.subr.mxu0 0.0
        %267 = vmatpush1.msra.mxu0 %v241
        %268 = vmatprep.subr.mxu0 0.0
        %269 = vmatpush1.msra.mxu0 %v242
        %270 = vmatprep.subr.mxu0 0.0
        %271 = vmatpush1.msra.mxu0 %v243
        %272 = vmatprep.subr.mxu0 0.0
        %273 = vmatpush1.msra.mxu0 %v244
        %274 = vmatprep.subr.mxu0 0.0
        %275 = vmatpush1.msra.mxu0 %v245
        %276 = vmatprep.subr.mxu0 0.0
        %277 = vmatpush1.msra.mxu0 %v246
        %278 = vmatprep.subr.mxu0 0.0
        %279 = vmatpush1.msra.mxu0 %v247
        %280 = vmatprep.subr.mxu0 0.0
        %281 = vmatpush1.msra.mxu0 0.0
        %282 = vmatprep.subr.mxu0 0.0
        %283 = vmatpush1.msra.mxu0 0.0
        %284 = vmatprep.subr.mxu0 0.0
        %285 = vmatpush1.msra.mxu0 0.0
        %286 = vmatprep.subr.mxu0 0.0
        %287 = vmatpush1.msra.mxu0 0.0
        %288 = vmatprep.subr.mxu0 0.0
        %289 = vmatpush1.msra.mxu0 0.0
        %290 = vmatprep.subr.mxu0 0.0
        %291 = vmatpush1.msra.mxu0 0.0
        %292 = vmatprep.subr.mxu0 0.0
        %293 = vmatpush1.msra.mxu0 0.0
        %294 = vmatprep.subr.mxu0 0.0
        %295 = vmatpush1.msra.mxu0 0.0
        %296 = vmatprep.subr.mxu0 0.0
        %297 = vmatpush1.msra.mxu0 0.0
        %298 = vmatprep.subr.mxu0 0.0
        %299 = vmatpush1.msra.mxu0 0.0
        %300 = vmatprep.subr.mxu0 0.0
        %301 = vmatpush1.msra.mxu0 0.0
        %302 = vmatprep.subr.mxu0 0.0
        %303 = vmatpush1.msra.mxu0 0.0
        %304 = vmatprep.subr.mxu0 0.0
        %305 = vmatpush1.msra.mxu0 0.0
        %306 = vmatprep.subr.mxu0 0.0
        %307 = vmatpush1.msra.mxu0 0.0
        %308 = vmatprep.subr.mxu0 0.0
        %309 = vmatpush1.msra.mxu0 0.0
        %310 = vmatprep.subr.mxu0 0.0
        %311 = vmatpush1.msra.mxu0 0.0
        %312 = vmatprep.mubr.f32.mxu0 0.0
        %313 = vmatmul.mubr.f32.gmra.mrb[0].mxu0 %v231
        %v314 = vpop.f32.mrb[0].mxu0
        %v315 = vadd.f32 0.0, %v314
        %v316 = vpop.f32.mrb[0].mxu0
        %317 = vdwg.mxu0
        %v318 = vadd.f32 %v230, %v315
        %319 = vst [vmem:[#allocation2] sm:$0xff] %v318
        // Predicated region
        $region45: #{tpu_custom_call.1} parent=31 // pred_check
          %p320 = pneg %p225
        $region46: #{tpu_custom_call.1} parent=31 // pred_check_branch
          %322 = sbr.rel (%p320) target = $region48
        $region47: #{tpu_custom_call.1} parent=31 // pred_region
          %v323 = vld [vmem:[#allocation2] sm:$0xff]
          %v324 = vld [vmem:[%s2] sm:$0x1]
          %v326 = vlaneseq
          %v327 = vshrl.u32 %v326, 7
          %v328 = vsub.s32 0, %v327
          %v329 = vrot.slane %v324, %v328
          %v331 = vadd.f32 %v323, %v329
          %v332 = vmul.f32 %v331, %v331
          %333 = vadd.xlane.f32.xlu0 %v332
          %v334 = vpop.xlane.xlu0 %333
          %v335 = vrsqrt.pop %v334
          %v336 = vmul.f32 %v334, %v335
          %vm337 = vcmp.eq.f32.partialorder %v334, inf
          %v338 = vsel %vm337, %v334, %v336
          %vm339 = vcmp.eq.f32.partialorder %v334, 0.0
          %v340 = vand.u32 %v334, 2147483648
          %v341 = vsel %vm339, %v340, %v338
          %v342 = vadd.f32 %v341, 1e-08
          %v343 = vrcp.pop %v342
          %v344 = vmul.f32 %v331, %v343
          %345 = vst [vmem:[%s223] sm:$0xff] %v344
        $region48: #{tpu_custom_call.1} parent=31 // pred_fallthru
          _
        %s346 = sand.u32 %s116, 1
        %s347 = scalar_lea.sflag [#allocation5], %s346
        %s348 = sand.u32 %s116, 1
        %s349 = smul.addr %s348, 8
        %s350 = scalar_lea.vmem [#allocation8], %s349
        // Predicated region
        $region49: #{tpu_custom_call.1} parent=31 // pred_check
          %p351 = pneg %p126
        $region50: #{tpu_custom_call.1} parent=31 // pred_check_branch
          %353 = sbr.rel (%p351) target = $region52
        $region51: #{tpu_custom_call.1} parent=31 // pred_region
          %s355 = ssub.s32 128, 128
          %356 = vsyncadd %s347, %s355
          %s357 = smul.addr %s25, 128
          %s358 = scalar_lea.hbm %s3, %s357
          %s360 = sshll.u32 %s350, 4
          %s361 = int_to_ptr.vmem [resolvable:$true] %s360
          %363 = dma.vmem_to_hbm [thread:$0]  %s361, 128, %s358, %s347
        $region52: #{tpu_custom_call.1} parent=31 // pred_fallthru
          _
      $region32: #{tpu_custom_call.1} parent=5 // pred_fallthru
        _
      %p364 = scmp.le.s32.totalorder 2, %s16
      // Predicated region
      $region53: #{tpu_custom_call.1} parent=5 // pred_check
        %p365 = pneg %p364
      $region54: #{tpu_custom_call.1} parent=5 // pred_check_branch
        %367 = sbr.rel (%p365) target = $region56
      $region55: #{tpu_custom_call.1} parent=5 // pred_region
        %s368 = ssub.s32 %s16, 2
        // Predicated region
        $region57: #{tpu_custom_call.1} parent=55 // pred_check
          %p369 = pneg %p132
        $region58: #{tpu_custom_call.1} parent=55 // pred_check_branch
          %371 = sbr.rel (%p369) target = $region60
        $region59: #{tpu_custom_call.1} parent=55 // pred_region
          %s372 = sand.u32 %s117, 1
          %s373 = scalar_lea.sflag [#allocation5], %s372
          %s374 = sand.u32 %s117, 1
          %s375 = smul.addr %s374, 8
          %s376 = scalar_lea.vmem [#allocation8], %s375
          %377 = dma.done %s373, 128
        $region60: #{tpu_custom_call.1} parent=55 // pred_fallthru
          _
      $region56: #{tpu_custom_call.1} parent=5 // pred_fallthru
        _
    $region6: #{tpu_custom_call.1} parent=1 // loop_footer
      %s20 = sadd.s32 1, %s16
    $region7: #{tpu_custom_call.1} parent=1 // loop_footer_branch
      %15 = sbr.rel target = $region3
    $region8: #{tpu_custom_call.1} parent=1 // loop_exit
      _
    %378 = vsyncpa [#allocation4], 1
    %s379 = scalar_lea.sflag [#allocation4], 1
    %380 = vsyncpa %s379, 1
    %381 = vsyncpa [#allocation7], 1
    %382 = vsyncpa [#allocation5], 1
    %s383 = scalar_lea.sflag [#allocation5], 1
    %384 = vsyncpa %s383, 1

</llo_original>
